<compile_context>
chip_gen: v7x
topology: tpu7x:2x2x1
jax: 0.10.0
libtpu: 0.0.40
codegen_flags: <defaults>
</compile_context>

<pallas_src>
import functools

import jax
import jax.numpy as jnp
from jax.experimental import pallas as pl
from jax.experimental.pallas import tpu as pltpu


_ROW_TILE = 256        # rows per batch tile (multiple of 8/16/32 sublane packs)
_MAX_COL_TILE = 2048   # upper bound on lanes per column tile


def _pick_col_tile(f1: int, max_tile: int = _MAX_COL_TILE) -> int:
    """Largest multiple-of-128 column tile that divides F1 (so the x2 region
    starts exactly on an output tile boundary -> all stores lane-aligned)."""
    assert f1 % 128 == 0
    cap = min(f1, max_tile)
    t = cap - (cap % 128)
    while t >= 128:
        if f1 % t == 0:
            return t
        t -= 128
    return 128  # unreachable (128 always divides f1 here)


def _merge_tiled_kernel(x1_ref, x2_ref, o_ref, *, c1):
    # Grid axis 1 walks the output column tiles: [0, c1) come from x1,
    # [c1, c1+c2) come from x2. Each step is one full-tile, lane-dense copy.
    j = pl.program_id(1)
    w2 = x2_ref.shape[1]  # == TC except when x2 fits in a single (smaller) block

    @pl.when(j < c1)
    def _():
        o_ref[...] = x1_ref[...].astype(o_ref.dtype)

    @pl.when(j >= c1)
    def _():
        o_ref[:, :w2] = x2_ref[...].astype(o_ref.dtype)


def _merge_rowwise_kernel(x1_ref, x2_ref, o_ref, *, f1):
    # Fallback for F1 not lane-aligned: full feature rows per batch tile.
    # The second store is masked/strided (correct, slower).
    o_ref[:, :f1] = x1_ref[...].astype(o_ref.dtype)
    o_ref[:, f1:] = x2_ref[...].astype(o_ref.dtype)


def merge(x1, x2):
    """Equivalent of Merge.forward: flatten both inputs and concat on axis 1."""
    n = x1.shape[0]
    assert x2.shape[0] == n, "batch dims must match"
    x1f = x1.reshape(n, -1)   # glue: row-major flatten, matches torch .view(N, -1)
    x2f = x2.reshape(n, -1)
    f1, f2 = x1f.shape[1], x2f.shape[1]
    fo = f1 + f2
    out_dtype = jnp.result_type(x1f.dtype, x2f.dtype)
    out_itemsize = jnp.dtype(out_dtype).itemsize

    # Pure data movement: tell XLA's scheduler it is bandwidth-bound.
    cost = pl.CostEstimate(
        flops=0,
        transcendentals=0,
        bytes_accessed=(n * f1 * x1f.dtype.itemsize
                        + n * f2 * x2f.dtype.itemsize
                        + n * fo * out_itemsize),
    )

    if f1 % 128 == 0:
        # ---- lane-aligned fast path: tile batch AND feature axis -------------
        tn = _ROW_TILE
        tc = _pick_col_tile(f1)
        c1 = f1 // tc              # x1 column tiles (exact)
        c2 = pl.cdiv(f2, tc)       # x2 column tiles (last may be partial)
        w2 = f2 if f2 <= tc else tc  # x2 input block width (never wider than x2)

        grid = (pl.cdiv(n, tn), c1 + c2)
        kernel = functools.partial(_merge_tiled_kernel, c1=c1)
        in_specs = [
            # x1 block stays resident (same index) once past its own range.
            pl.BlockSpec((tn, tc), lambda i, j: (i, jnp.minimum(j, c1 - 1))),
            # x2 block is pinned to 0 until its range starts, then streams.
            pl.BlockSpec((tn, w2), lambda i, j: (i, jnp.maximum(j - c1, 0))),
        ]
        out_specs = pl.BlockSpec((tn, tc), lambda i, j: (i, j))
        dims = ("parallel", "arbitrary")
    else:
        # ---- fallback: batch-tiled, full feature rows per block ---------------
        pack = {1: 32, 2: 16, 4: 8}.get(out_itemsize, 8)
        row_bytes = (f1 * x1f.dtype.itemsize + f2 * x2f.dtype.itemsize
                     + fo * out_itemsize)
        budget = 12 * 1024 * 1024  # double-buffered working-set target
        tn = (budget // (2 * row_bytes)) // pack * pack
        tn = int(max(pack, min(tn, 1024)))

        grid = (pl.cdiv(n, tn),)
        kernel = functools.partial(_merge_rowwise_kernel, f1=f1)
        in_specs = [
            pl.BlockSpec((tn, f1), lambda i: (i, 0)),
            pl.BlockSpec((tn, f2), lambda i: (i, 0)),
        ]
        out_specs = pl.BlockSpec((tn, fo), lambda i: (i, 0))
        dims = ("parallel",)

    return pl.pallas_call(
        kernel,
        out_shape=jax.ShapeDtypeStruct((n, fo), out_dtype),
        grid=grid,
        in_specs=in_specs,
        out_specs=out_specs,
        compiler_params=pltpu.CompilerParams(
            dimension_semantics=dims,
            vmem_limit_bytes=32 * 1024 * 1024,  # safe on v5e/v6e/v7x, >> footprint
        ),
        cost_estimate=cost,
    )(x1f, x2f)


if __name__ == "__main__":
    key = jax.random.PRNGKey(0)
    k1, k2 = jax.random.split(key)

    # Small NCHW-style inputs (as would come from two conv branches).
    x1 = jax.random.normal(k1, (2, 4, 16, 16), dtype=jnp.float32)  # -> (2, 1024)
    x2 = jax.random.normal(k2, (2, 4, 8, 8), dtype=jnp.float32)    # -> (2, 256)

    out = merge(x1, x2)
    out = jax.block_until_ready(out)

    # Reference check against plain-JAX semantics of the PyTorch module.
    ref = jnp.concatenate(
        [x1.reshape(x1.shape[0], -1), x2.reshape(x2.shape[0], -1)], axis=1
    )
    assert out.shape == ref.shape, (out.shape, ref.shape)
    assert jnp.array_equal(out, ref), "Pallas merge mismatch vs reference"

    print("KERNEL_OK")
</pallas_src>

<mosaic_0001>
module attributes {stable_mosaic.version = 11 : i64} {
  func.func @_merge_tiled_kernel(%arg0: i32, %arg1: i32, %arg2: memref<256x1024xf32, #tpu.memory_space<vmem>>, %arg3: memref<256x256xf32, #tpu.memory_space<vmem>>, %arg4: memref<256x1024xf32, #tpu.memory_space<vmem>>) attributes {dimension_semantics = [#tpu.dimension_semantics<parallel>, #tpu.dimension_semantics<arbitrary>], iteration_bounds = array<i64: 1, 2>, scalar_prefetch = 0 : i64, scratch_operands = 0 : i64, tpu.core_type = #tpu.core_type<tc>, window_params = [{transform_indices = @transform_0, window_bounds = array<i64: 256, 1024>}, {transform_indices = @transform_1, window_bounds = array<i64: 256, 256>}, {transform_indices = @transform_2, window_bounds = array<i64: 256, 1024>}]} {
    %c1_i32 = arith.constant 1 : i32
    %0 = arith.cmpi slt, %arg1, %c1_i32 : i32
    %1 = arith.extui %0 : i1 to i32
    %c0_i32 = arith.constant 0 : i32
    %2 = arith.cmpi ne, %1, %c0_i32 : i32
    scf.if %2 {
      %c0 = arith.constant 0 : index
      %c0_2 = arith.constant 0 : index
      %6 = vector.load %arg2[%c0, %c0_2] : memref<256x1024xf32, #tpu.memory_space<vmem>>, vector<256x1024xf32>
      %c0_3 = arith.constant 0 : index
      %c0_4 = arith.constant 0 : index
      %7 = vector.load %arg4[%c0_3, %c0_4] : memref<256x1024xf32, #tpu.memory_space<vmem>>, vector<256x1024xf32>
      tpu.vector_store %arg4[%c0_3, %c0_4], %6 {strides = array<i32>} : memref<256x1024xf32, #tpu.memory_space<vmem>>, vector<256x1024xf32>,
    } else {
    }
    %c1_i32_0 = arith.constant 1 : i32
    %3 = arith.cmpi sge, %arg1, %c1_i32_0 : i32
    %4 = arith.extui %3 : i1 to i32
    %c0_i32_1 = arith.constant 0 : i32
    %5 = arith.cmpi ne, %4, %c0_i32_1 : i32
    scf.if %5 {
      %c0 = arith.constant 0 : index
      %c0_2 = arith.constant 0 : index
      %6 = vector.load %arg3[%c0, %c0_2] : memref<256x256xf32, #tpu.memory_space<vmem>>, vector<256x256xf32>
      %c0_3 = arith.constant 0 : index
      %c0_4 = arith.constant 0 : index
      %7 = vector.load %arg4[%c0_3, %c0_4] : memref<256x1024xf32, #tpu.memory_space<vmem>>, vector<256x256xf32>
      tpu.vector_store %arg4[%c0_3, %c0_4], %6 {strides = array<i32>} : memref<256x1024xf32, #tpu.memory_space<vmem>>, vector<256x256xf32>,
    } else {
    }
    return
  }
  func.func @transform_0(%arg0: i32, %arg1: i32) -> (i32, i32) {
    %c0_i32 = arith.constant 0 : i32
    %0 = arith.minsi %arg1, %c0_i32 : i32
    %c0_i32_0 = arith.constant 0 : i32
    return %arg0, %0 : i32, i32
  }
  func.func @transform_1(%arg0: i32, %arg1: i32) -> (i32, i32) {
    %c1_i32 = arith.constant 1 : i32
    %0 = arith.subi %arg1, %c1_i32 : i32
    %c0_i32 = arith.constant 0 : i32
    %1 = arith.maxsi %0, %c0_i32 : i32
    %c0_i32_0 = arith.constant 0 : i32
    return %arg0, %1 : i32, i32
  }
  func.func @transform_2(%arg0: i32, %arg1: i32) -> (i32, i32) {
    %c0_i32 = arith.constant 0 : i32
    return %arg0, %arg1 : i32, i32
  }
}

</mosaic_0001>

<llo_original>
// kernel: tpu_custom_call.1
$region0: #{tpu_custom_call.1}
  #allocation0 [shape = 'u32[]', space=smem, size = 0x4, offset = 0x4, fixed_abs, tag = 'smem constant byte address 0x4 - core index']
  #allocation1 [shape = 'u32[144,128]{1,0:T(1,128)}', space=vmem, size = 0x12000, scoped, tag = 'internal scratch']
  %s0 = inlined_call_operand.hbm [shape: f32[2,1024], index: 0, kind: input, shape index: {}]
  %s1 = inlined_call_operand.hbm [shape: f32[2,256], index: 1, kind: input, shape index: {}]
  %s2 = inlined_call_operand.hbm [shape: f32[2,1280], index: 2, kind: output, shape index: {}]
  %s3 = sld [smem:[#allocation0]]
  $region57: #{tpu_custom_call.1} parent=0
    _
  %s5 = ssub.s32 1, %s3
  %s6 = scalar_select 0, %s5, %s3
  $region1: #{tpu_custom_call.1} parent=0
    #allocation2 [shape = 'u8[2097152]{0}', space=vmem, size = 0x200000, scoped, tag = 'input window, operand 0']
    #allocation3 [shape = 's32[2]{0}', space=sflag, size = 0x8, scoped, tag = 'scoped memory for tpu_custom_call.1']
    #allocation4 [shape = 's32[2]{0}', space=sflag, size = 0x8, scoped, tag = 'scoped memory for tpu_custom_call.1']
    #allocation5 [shape = 'u8[524288]{0}', space=vmem, size = 0x80000, scoped, tag = 'input window, operand 1']
    #allocation6 [shape = 's32[2]{0}', space=sflag, size = 0x8, scoped, tag = 'scoped memory for tpu_custom_call.1']
    #allocation7 [shape = 'u8[2097152]{0}', space=vmem, size = 0x200000, scoped, tag = 'output window, operand 0']
    %7 = vsyncpa [#allocation3], 0
    %s8 = scalar_lea.sflag [#allocation3], 1
    %9 = vsyncpa %s8, 0
    %10 = vsyncpa [#allocation6], 0
    %s11 = scalar_lea.sflag [#allocation6], 1
    %12 = vsyncpa %s11, 0
    %13 = vsyncpa [#allocation4], 0
    %s14 = scalar_lea.sflag [#allocation4], 1
    %15 = vsyncpa %s14, 0
    loop: start=0, step=1, limit=4
    $region2: #{tpu_custom_call.1} parent=1 // loop_pre_header
      _
    $region3: #{tpu_custom_call.1} parent=1 // loop_header
      %s17 = sphi 0, %s21
      %p18 = scmp.ge.s32.totalorder %s17, 4
      %s24 = sphi 0, %s36
      %s25 = sphi 0, %s32
      %s26 = sphi 0, %s24
      %s27 = sphi 0, %s25
      %s28 = sphi 0, %s26
      %s29 = sphi 0, %s27
      %s45 = sphi 0, %s47
      %s48 = sphi 0, %s45
      %s49 = sphi 0, %s48
      %s65 = sphi 0, %s49
      %s79 = sphi 0, %s81
      %s82 = sphi 0, %s79
      %s83 = sphi 0, %s82
      %s99 = sphi 0, %s83
      %s107 = sphi 0, %s109
      %s110 = sphi 0, %s107
      %s111 = sphi 0, %s110
      %s127 = sphi 0, %s111
    $region4: #{tpu_custom_call.1} parent=1 // loop_header_branch
      %20 = sbr.rel (%p18) target = $region8
    $region5: #{tpu_custom_call.1} parent=1 // loop_body
      %s22 = ssub.s32 %s17, 1
      %s23 = ssub.s32 %s17, 2
      %s30 = sadd.s32 1, %s25
      %p31 = scmp.ge.s32.totalorder %s30, 2
      %s32 = scalar_select %p31, 0, %s30
      %s33 = sadd.s32 1, %s24
      %s34 = scalar_select %p31, %s33, %s24
      %p35 = scmp.ge.s32.totalorder %s34, 1
      %s36 = scalar_select %p35, 0, %s34
      %p37 = scmp.lt.s32.totalorder %s25, 0
      %s38 = scalar_select %p37, %s25, 0
      %p39 = scmp.lt.s32.totalorder %s32, 0
      %s40 = scalar_select %p39, %s32, 0
      %s41 = ssub.s32 %s24, %s36
      %s42 = ssub.s32 %s38, %s40
      %s43 = sor.u32 %s41, %s42
      %p44 = scmp.eq.s32.totalorder %s43, 0
      %s46 = sadd.s32 %s45, 1
      %s47 = scalar_select %p44, %s45, %s46
      %p50 = pneg %p44
      %p51 = scmp.eq.s32.totalorder %s17, 1
      %p52 = por %p50, %p51
      %p53 = scmp.ne.s32.totalorder %s45, %s48
      %p54 = scmp.eq.s32.totalorder %s17, 0
      %p55 = por %p53, %p54
      %p56 = scmp.ne.s32.totalorder %s45, %s48
      %p57 = scmp.eq.s32.totalorder %s22, 1
      %p58 = por %p56, %p57
      %p59 = scmp.ne.s32.totalorder %s48, %s49
      %p60 = scmp.eq.s32.totalorder %s22, 0
      %p61 = por %p59, %p60
      %p62 = scmp.ne.s32.totalorder %s48, %s49
      %p63 = scmp.eq.s32.totalorder %s23, 1
      %p64 = por %p62, %p63
      %p66 = scmp.ne.s32.totalorder %s49, %s65
      %p67 = scmp.eq.s32.totalorder %s23, 0
      %p68 = por %p66, %p67
      %s69 = ssub.s32 %s25, 1
      %p70 = scmp.gt.s32.totalorder %s69, 0
      %s71 = scalar_select %p70, %s69, 0
      %s72 = ssub.s32 %s32, 1
      %p73 = scmp.gt.s32.totalorder %s72, 0
      %s74 = scalar_select %p73, %s72, 0
      %s75 = ssub.s32 %s24, %s36
      %s76 = ssub.s32 %s71, %s74
      %s77 = sor.u32 %s75, %s76
      %p78 = scmp.eq.s32.totalorder %s77, 0
      %s80 = sadd.s32 %s79, 1
      %s81 = scalar_select %p78, %s79, %s80
      %p84 = pneg %p78
      %p85 = scmp.eq.s32.totalorder %s17, 1
      %p86 = por %p84, %p85
      %p87 = scmp.ne.s32.totalorder %s79, %s82
      %p88 = scmp.eq.s32.totalorder %s17, 0
      %p89 = por %p87, %p88
      %p90 = scmp.ne.s32.totalorder %s79, %s82
      %p91 = scmp.eq.s32.totalorder %s22, 1
      %p92 = por %p90, %p91
      %p93 = scmp.ne.s32.totalorder %s82, %s83
      %p94 = scmp.eq.s32.totalorder %s22, 0
      %p95 = por %p93, %p94
      %p96 = scmp.ne.s32.totalorder %s82, %s83
      %p97 = scmp.eq.s32.totalorder %s23, 1
      %p98 = por %p96, %p97
      %p100 = scmp.ne.s32.totalorder %s83, %s99
      %p101 = scmp.eq.s32.totalorder %s23, 0
      %p102 = por %p100, %p101
      %s103 = ssub.s32 %s24, %s36
      %s104 = ssub.s32 %s25, %s32
      %s105 = sor.u32 %s103, %s104
      %p106 = scmp.eq.s32.totalorder %s105, 0
      %s108 = sadd.s32 %s107, 1
      %s109 = scalar_select %p106, %s107, %s108
      %p112 = pneg %p106
      %p113 = scmp.eq.s32.totalorder %s17, 1
      %p114 = por %p112, %p113
      %p115 = scmp.ne.s32.totalorder %s107, %s110
      %p116 = scmp.eq.s32.totalorder %s17, 0
      %p117 = por %p115, %p116
      %p118 = scmp.ne.s32.totalorder %s107, %s110
      %p119 = scmp.eq.s32.totalorder %s22, 1
      %p120 = por %p118, %p119
      %p121 = scmp.ne.s32.totalorder %s110, %s111
      %p122 = scmp.eq.s32.totalorder %s22, 0
      %p123 = por %p121, %p122
      %p124 = scmp.ne.s32.totalorder %s110, %s111
      %p125 = scmp.eq.s32.totalorder %s23, 1
      %p126 = por %p124, %p125
      %p128 = scmp.ne.s32.totalorder %s111, %s127
      %p129 = scmp.eq.s32.totalorder %s23, 0
      %p130 = por %p128, %p129
      %p131 = scmp.le.s32.totalorder 1, %s17
      %p132 = scmp.lt.s32.totalorder %s17, 3
      %p133 = pnand %p131, %p132
      %p134 = pneg %p133
      // Predicated region
      $region9: #{tpu_custom_call.1} parent=5 // pred_check
        _
      $region10: #{tpu_custom_call.1} parent=5 // pred_check_branch
        %136 = sbr.rel (%p133) target = $region12
      $region11: #{tpu_custom_call.1} parent=5 // pred_region
        %s137 = ssub.s32 %s17, 1
      $region12: #{tpu_custom_call.1} parent=5 // pred_fallthru
        _
      %p138 = scmp.lt.s32.totalorder %s17, 2
      // Predicated region
      $region13: #{tpu_custom_call.1} parent=5 // pred_check
        %p139 = pneg %p138
      $region14: #{tpu_custom_call.1} parent=5 // pred_check_branch
        %141 = sbr.rel (%p139) target = $region16
      $region15: #{tpu_custom_call.1} parent=5 // pred_region
        // Predicated region
        $region17: #{tpu_custom_call.1} parent=15 // pred_check
          %p142 = pneg %p55
        $region18: #{tpu_custom_call.1} parent=15 // pred_check_branch
          %144 = sbr.rel (%p142) target = $region20
        $region19: #{tpu_custom_call.1} parent=15 // pred_region
          %s145 = sand.u32 %s45, 1
          %s146 = scalar_lea.sflag [#allocation3], %s145
          %s147 = sand.u32 %s45, 1
          %s148 = smul.addr %s147, 2048
          %s149 = scalar_lea.vmem [#allocation2], %s148
          %p150 = scmp.lt.s32.totalorder %s25, 0
          %s151 = scalar_select %p150, %s25, 0
          %s152 = smul.u32 128, %s24
          %s153 = smul.u32 8, %s151
          %s154 = ssub.s32 1, %s152
          %s155 = smul.u32 32, %s154
          %s156 = smul.u32 %s155, 8
          %s158 = ssub.s32 32768, %s156
          %159 = vsyncadd %s146, %s158
          %p160 = scmp.ne.s32.totalorder 0, %s156
          %s161 = smul.addr %s152, 8
          %s162 = sadd.s32 %s153, %s161
          %s163 = smul.addr %s162, 32
          %s164 = scalar_lea.hbm %s0, %s163
          %s165 = smul.u32 16, %s154
          %s166 = sshll.u32 %s149, 4
          %s167 = int_to_ptr.vmem [resolvable:$true] %s166
          %s168 = sshll.u32 %s165, 4
          %172 = dma.hbm_to_vmem [thread:$0]  (%p160), %s164, %s168, %s167, %s146, 256, 256, 16
        $region20: #{tpu_custom_call.1} parent=15 // pred_fallthru
          _
        // Predicated region
        $region21: #{tpu_custom_call.1} parent=15 // pred_check
          %p173 = pneg %p89
        $region22: #{tpu_custom_call.1} parent=15 // pred_check_branch
          %175 = sbr.rel (%p173) target = $region24
        $region23: #{tpu_custom_call.1} parent=15 // pred_region
          %s176 = sand.u32 %s79, 1
          %s177 = scalar_lea.sflag [#allocation6], %s176
          %s178 = sand.u32 %s79, 1
          %s179 = smul.addr %s178, 512
          %s180 = scalar_lea.vmem [#allocation5], %s179
          %s181 = ssub.s32 %s25, 1
          %p182 = scmp.gt.s32.totalorder %s181, 0
          %s183 = scalar_select %p182, %s181, 0
          %s184 = smul.u32 128, %s24
          %s185 = smul.u32 2, %s183
          %s186 = ssub.s32 1, %s184
          %s187 = smul.u32 32, %s186
          %s188 = smul.u32 %s187, 2
          %s190 = ssub.s32 8192, %s188
          %191 = vsyncadd %s177, %s190
          %p192 = scmp.ne.s32.totalorder 0, %s188
          %s193 = smul.addr %s184, 2
          %s194 = sadd.s32 %s185, %s193
          %s195 = smul.addr %s194, 32
          %s196 = scalar_lea.hbm %s1, %s195
          %s197 = smul.u32 4, %s186
          %s198 = sshll.u32 %s180, 4
          %s199 = int_to_ptr.vmem [resolvable:$true] %s198
          %s200 = sshll.u32 %s197, 4
          %204 = dma.hbm_to_vmem [thread:$0]  (%p192), %s196, %s200, %s199, %s177, 64, 64, 4
        $region24: #{tpu_custom_call.1} parent=15 // pred_fallthru
          _
      $region16: #{tpu_custom_call.1} parent=5 // pred_fallthru
        _
      %p205 = scmp.le.s32.totalorder 1, %s17
      %p206 = scmp.lt.s32.totalorder %s17, 3
      %p207 = pnand %p205, %p206
      %p208 = pneg %p207
      // Predicated region
      $region25: #{tpu_custom_call.1} parent=5 // pred_check
        _
      $region26: #{tpu_custom_call.1} parent=5 // pred_check_branch
        %210 = sbr.rel (%p207) target = $region28
      $region27: #{tpu_custom_call.1} parent=5 // pred_region
        %s211 = ssub.s32 %s17, 1
        %s212 = sand.u32 %s48, 1
        %s213 = scalar_lea.sflag [#allocation3], %s212
        %s214 = sand.u32 %s48, 1
        %s215 = smul.addr %s214, 2048
        %s216 = scalar_lea.vmem [#allocation2], %s215
        // Predicated region
        $region29: #{tpu_custom_call.1} parent=27 // pred_check
          %p217 = pneg %p61
        $region30: #{tpu_custom_call.1} parent=27 // pred_check_branch
          %219 = sbr.rel (%p217) target = $region32
        $region31: #{tpu_custom_call.1} parent=27 // pred_region
          %220 = dma.done %s213, 32768
        $region32: #{tpu_custom_call.1} parent=27 // pred_fallthru
          _
        %s221 = sand.u32 %s82, 1
        %s222 = scalar_lea.sflag [#allocation6], %s221
        %s223 = sand.u32 %s82, 1
        %s224 = smul.addr %s223, 512
        %s225 = scalar_lea.vmem [#allocation5], %s224
        // Predicated region
        $region33: #{tpu_custom_call.1} parent=27 // pred_check
          %p226 = pneg %p95
        $region34: #{tpu_custom_call.1} parent=27 // pred_check_branch
          %228 = sbr.rel (%p226) target = $region36
        $region35: #{tpu_custom_call.1} parent=27 // pred_region
          %229 = dma.done %s222, 8192
        $region36: #{tpu_custom_call.1} parent=27 // pred_fallthru
          _
        %s230 = sand.u32 %s48, 1
        %s231 = scalar_lea.sflag [#allocation3], %s230
        %s232 = sand.u32 %s48, 1
        %s233 = smul.addr %s232, 2048
        %s234 = scalar_lea.vmem [#allocation2], %s233
        %p235 = pneg %p61
        %p236 = pneg %p58
        %s237 = sand.u32 %s82, 1
        %s238 = scalar_lea.sflag [#allocation6], %s237
        %s239 = sand.u32 %s82, 1
        %s240 = smul.addr %s239, 512
        %s241 = scalar_lea.vmem [#allocation5], %s240
        %p242 = pneg %p95
        %p243 = pneg %p92
        %p244 = pneg %p123
        %p245 = pneg %p120
        %s246 = sand.u32 %s110, 1
        %s247 = scalar_lea.sflag [#allocation4], %s246
        %s248 = sand.u32 %s110, 1
        %s249 = smul.addr %s248, 2048
        %s250 = scalar_lea.vmem [#allocation7], %s249
        %p251 = scmp.lt.s32.totalorder %s27, 0
        %s252 = scalar_select %p251, %s27, 0
        %s253 = smul.u32 128, %s26
        %s254 = smul.u32 8, %s252
        %s255 = ssub.s32 1, %s253
        %s256 = smul.u32 32, %s255
        %s257 = smul.u32 %s256, 8
        %s258 = ssub.s32 %s27, 1
        %p259 = scmp.gt.s32.totalorder %s258, 0
        %s260 = scalar_select %p259, %s258, 0
        %s261 = smul.u32 128, %s26
        %s262 = smul.u32 2, %s260
        %s263 = ssub.s32 1, %s261
        %s264 = smul.u32 32, %s263
        %s265 = smul.u32 %s264, 2
        %s266 = smul.u32 128, %s26
        %s267 = smul.u32 8, %s27
        %s268 = ssub.s32 1, %s266
        %s269 = smul.u32 32, %s268
        %s270 = ssub.s32 10, %s267
        %p271 = scmp.lt.s32.totalorder %s270, 8
        %s272 = scalar_select %p271, %s270, 8
        %s273 = smul.u32 %s269, %s272
        %p274 = scmp.lt.s32.totalorder %s27, 1
        // Predicated region
        $region37: #{tpu_custom_call.1} parent=27 // pred_check
          %p275 = pneg %p274
        $region38: #{tpu_custom_call.1} parent=27 // pred_check_branch
          %277 = sbr.rel (%p275) target = $region40
        $region39: #{tpu_custom_call.1} parent=27 // pred_region
          %v278 = vld [vmem:[%s216] sm:$0xff]
          %v279 = vld [vmem:[%s216 + $0x8] sm:$0xff]
          %v280 = vld [vmem:[%s216 + $0x10] sm:$0xff]
          %v281 = vld [vmem:[%s216 + $0x18] sm:$0xff]
          %v282 = vld [vmem:[%s216 + $0x20] sm:$0xff]
          %v283 = vld [vmem:[%s216 + $0x28] sm:$0xff]
          %v284 = vld [vmem:[%s216 + $0x30] sm:$0xff]
          %v285 = vld [vmem:[%s216 + $0x38] sm:$0xff]
          %v286 = vld [vmem:[%s216 + $0x40] sm:$0xff]
          %v287 = vld [vmem:[%s216 + $0x48] sm:$0xff]
          %v288 = vld [vmem:[%s216 + $0x50] sm:$0xff]
          %v289 = vld [vmem:[%s216 + $0x58] sm:$0xff]
          %v290 = vld [vmem:[%s216 + $0x60] sm:$0xff]
          %v291 = vld [vmem:[%s216 + $0x68] sm:$0xff]
          %v292 = vld [vmem:[%s216 + $0x70] sm:$0xff]
          %v293 = vld [vmem:[%s216 + $0x78] sm:$0xff]
          %v294 = vld [vmem:[%s216 + $0x80] sm:$0xff]
          %v295 = vld [vmem:[%s216 + $0x88] sm:$0xff]
          %v296 = vld [vmem:[%s216 + $0x90] sm:$0xff]
          %v297 = vld [vmem:[%s216 + $0x98] sm:$0xff]
          %v298 = vld [vmem:[%s216 + $0xa0] sm:$0xff]
          %v299 = vld [vmem:[%s216 + $0xa8] sm:$0xff]
          %v300 = vld [vmem:[%s216 + $0xb0] sm:$0xff]
          %v301 = vld [vmem:[%s216 + $0xb8] sm:$0xff]
          %v302 = vld [vmem:[%s216 + $0xc0] sm:$0xff]
          %v303 = vld [vmem:[%s216 + $0xc8] sm:$0xff]
          %v304 = vld [vmem:[%s216 + $0xd0] sm:$0xff]
          %v305 = vld [vmem:[%s216 + $0xd8] sm:$0xff]
          %v306 = vld [vmem:[%s216 + $0xe0] sm:$0xff]
          %v307 = vld [vmem:[%s216 + $0xe8] sm:$0xff]
          %v308 = vld [vmem:[%s216 + $0xf0] sm:$0xff]
          %v309 = vld [vmem:[%s216 + $0xf8] sm:$0xff]
          %v310 = vld [vmem:[%s216 + $0x100] sm:$0xff]
          %v311 = vld [vmem:[%s216 + $0x108] sm:$0xff]
          %v312 = vld [vmem:[%s216 + $0x110] sm:$0xff]
          %v313 = vld [vmem:[%s216 + $0x118] sm:$0xff]
          %v314 = vld [vmem:[%s216 + $0x120] sm:$0xff]
          %v315 = vld [vmem:[%s216 + $0x128] sm:$0xff]
          %v316 = vld [vmem:[%s216 + $0x130] sm:$0xff]
          %v317 = vld [vmem:[%s216 + $0x138] sm:$0xff]
          %v318 = vld [vmem:[%s216 + $0x140] sm:$0xff]
          %v319 = vld [vmem:[%s216 + $0x148] sm:$0xff]
          %v320 = vld [vmem:[%s216 + $0x150] sm:$0xff]
          %v321 = vld [vmem:[%s216 + $0x158] sm:$0xff]
          %v322 = vld [vmem:[%s216 + $0x160] sm:$0xff]
          %v323 = vld [vmem:[%s216 + $0x168] sm:$0xff]
          %v324 = vld [vmem:[%s216 + $0x170] sm:$0xff]
          %v325 = vld [vmem:[%s216 + $0x178] sm:$0xff]
          %v326 = vld [vmem:[%s216 + $0x180] sm:$0xff]
          %v327 = vld [vmem:[%s216 + $0x188] sm:$0xff]
          %v328 = vld [vmem:[%s216 + $0x190] sm:$0xff]
          %v329 = vld [vmem:[%s216 + $0x198] sm:$0xff]
          %v330 = vld [vmem:[%s216 + $0x1a0] sm:$0xff]
          %v331 = vld [vmem:[%s216 + $0x1a8] sm:$0xff]
          %v332 = vld [vmem:[%s216 + $0x1b0] sm:$0xff]
          %v333 = vld [vmem:[%s216 + $0x1b8] sm:$0xff]
          %v334 = vld [vmem:[%s216 + $0x1c0] sm:$0xff]
          %v335 = vld [vmem:[%s216 + $0x1c8] sm:$0xff]
          %v336 = vld [vmem:[%s216 + $0x1d0] sm:$0xff]
          %v337 = vld [vmem:[%s216 + $0x1d8] sm:$0xff]
          %v338 = vld [vmem:[%s216 + $0x1e0] sm:$0xff]
          %v339 = vld [vmem:[%s216 + $0x1e8] sm:$0xff]
          %v340 = vld [vmem:[%s216 + $0x1f0] sm:$0xff]
          %v341 = vld [vmem:[%s216 + $0x1f8] sm:$0xff]
          %v342 = vld [vmem:[%s216 + $0x200] sm:$0xff]
          %v343 = vld [vmem:[%s216 + $0x208] sm:$0xff]
          %v344 = vld [vmem:[%s216 + $0x210] sm:$0xff]
          %v345 = vld [vmem:[%s216 + $0x218] sm:$0xff]
          %v346 = vld [vmem:[%s216 + $0x220] sm:$0xff]
          %v347 = vld [vmem:[%s216 + $0x228] sm:$0xff]
          %v348 = vld [vmem:[%s216 + $0x230] sm:$0xff]
          %v349 = vld [vmem:[%s216 + $0x238] sm:$0xff]
          %v350 = vld [vmem:[%s216 + $0x240] sm:$0xff]
          %v351 = vld [vmem:[%s216 + $0x248] sm:$0xff]
          %v352 = vld [vmem:[%s216 + $0x250] sm:$0xff]
          %v353 = vld [vmem:[%s216 + $0x258] sm:$0xff]
          %v354 = vld [vmem:[%s216 + $0x260] sm:$0xff]
          %v355 = vld [vmem:[%s216 + $0x268] sm:$0xff]
          %v356 = vld [vmem:[%s216 + $0x270] sm:$0xff]
          %v357 = vld [vmem:[%s216 + $0x278] sm:$0xff]
          %v358 = vld [vmem:[%s216 + $0x280] sm:$0xff]
          %v359 = vld [vmem:[%s216 + $0x288] sm:$0xff]
          %v360 = vld [vmem:[%s216 + $0x290] sm:$0xff]
          %v361 = vld [vmem:[%s216 + $0x298] sm:$0xff]
          %v362 = vld [vmem:[%s216 + $0x2a0] sm:$0xff]
          %v363 = vld [vmem:[%s216 + $0x2a8] sm:$0xff]
          %v364 = vld [vmem:[%s216 + $0x2b0] sm:$0xff]
          %v365 = vld [vmem:[%s216 + $0x2b8] sm:$0xff]
          %v366 = vld [vmem:[%s216 + $0x2c0] sm:$0xff]
          %v367 = vld [vmem:[%s216 + $0x2c8] sm:$0xff]
          %v368 = vld [vmem:[%s216 + $0x2d0] sm:$0xff]
          %v369 = vld [vmem:[%s216 + $0x2d8] sm:$0xff]
          %v370 = vld [vmem:[%s216 + $0x2e0] sm:$0xff]
          %v371 = vld [vmem:[%s216 + $0x2e8] sm:$0xff]
          %v372 = vld [vmem:[%s216 + $0x2f0] sm:$0xff]
          %v373 = vld [vmem:[%s216 + $0x2f8] sm:$0xff]
          %v374 = vld [vmem:[%s216 + $0x300] sm:$0xff]
          %v375 = vld [vmem:[%s216 + $0x308] sm:$0xff]
          %v376 = vld [vmem:[%s216 + $0x310] sm:$0xff]
          %v377 = vld [vmem:[%s216 + $0x318] sm:$0xff]
          %v378 = vld [vmem:[%s216 + $0x320] sm:$0xff]
          %v379 = vld [vmem:[%s216 + $0x328] sm:$0xff]
          %v380 = vld [vmem:[%s216 + $0x330] sm:$0xff]
          %v381 = vld [vmem:[%s216 + $0x338] sm:$0xff]
          %v382 = vld [vmem:[%s216 + $0x340] sm:$0xff]
          %v383 = vld [vmem:[%s216 + $0x348] sm:$0xff]
          %v384 = vld [vmem:[%s216 + $0x350] sm:$0xff]
          %v385 = vld [vmem:[%s216 + $0x358] sm:$0xff]
          %v386 = vld [vmem:[%s216 + $0x360] sm:$0xff]
          %v387 = vld [vmem:[%s216 + $0x368] sm:$0xff]
          %v388 = vld [vmem:[%s216 + $0x370] sm:$0xff]
          %v389 = vld [vmem:[%s216 + $0x378] sm:$0xff]
          %v390 = vld [vmem:[%s216 + $0x380] sm:$0xff]
          %v391 = vld [vmem:[%s216 + $0x388] sm:$0xff]
          %v392 = vld [vmem:[%s216 + $0x390] sm:$0xff]
          %v393 = vld [vmem:[%s216 + $0x398] sm:$0xff]
          %v394 = vld [vmem:[%s216 + $0x3a0] sm:$0xff]
          %v395 = vld [vmem:[%s216 + $0x3a8] sm:$0xff]
          %v396 = vld [vmem:[%s216 + $0x3b0] sm:$0xff]
          %v397 = vld [vmem:[%s216 + $0x3b8] sm:$0xff]
          %v398 = vld [vmem:[%s216 + $0x3c0] sm:$0xff]
          %v399 = vld [vmem:[%s216 + $0x3c8] sm:$0xff]
          %v400 = vld [vmem:[%s216 + $0x3d0] sm:$0xff]
          %v401 = vld [vmem:[%s216 + $0x3d8] sm:$0xff]
          %v402 = vld [vmem:[%s216 + $0x3e0] sm:$0xff]
          %v403 = vld [vmem:[%s216 + $0x3e8] sm:$0xff]
          %v404 = vld [vmem:[%s216 + $0x3f0] sm:$0xff]
          %v405 = vld [vmem:[%s216 + $0x3f8] sm:$0xff]
          %v406 = vld [vmem:[%s216 + $0x400] sm:$0xff]
          %v407 = vld [vmem:[%s216 + $0x408] sm:$0xff]
          %v408 = vld [vmem:[%s216 + $0x410] sm:$0xff]
          %v409 = vld [vmem:[%s216 + $0x418] sm:$0xff]
          %v410 = vld [vmem:[%s216 + $0x420] sm:$0xff]
          %v411 = vld [vmem:[%s216 + $0x428] sm:$0xff]
          %v412 = vld [vmem:[%s216 + $0x430] sm:$0xff]
          %v413 = vld [vmem:[%s216 + $0x438] sm:$0xff]
          %v414 = vld [vmem:[%s216 + $0x440] sm:$0xff]
          %v415 = vld [vmem:[%s216 + $0x448] sm:$0xff]
          %v416 = vld [vmem:[%s216 + $0x450] sm:$0xff]
          %v417 = vld [vmem:[%s216 + $0x458] sm:$0xff]
          %v418 = vld [vmem:[%s216 + $0x460] sm:$0xff]
          %v419 = vld [vmem:[%s216 + $0x468] sm:$0xff]
          %v420 = vld [vmem:[%s216 + $0x470] sm:$0xff]
          %v421 = vld [vmem:[%s216 + $0x478] sm:$0xff]
          %v422 = vld [vmem:[%s216 + $0x480] sm:$0xff]
          %v423 = vld [vmem:[%s216 + $0x488] sm:$0xff]
          %v424 = vld [vmem:[%s216 + $0x490] sm:$0xff]
          %v425 = vld [vmem:[%s216 + $0x498] sm:$0xff]
          %v426 = vld [vmem:[%s216 + $0x4a0] sm:$0xff]
          %v427 = vld [vmem:[%s216 + $0x4a8] sm:$0xff]
          %v428 = vld [vmem:[%s216 + $0x4b0] sm:$0xff]
          %v429 = vld [vmem:[%s216 + $0x4b8] sm:$0xff]
          %v430 = vld [vmem:[%s216 + $0x4c0] sm:$0xff]
          %v431 = vld [vmem:[%s216 + $0x4c8] sm:$0xff]
          %v432 = vld [vmem:[%s216 + $0x4d0] sm:$0xff]
          %v433 = vld [vmem:[%s216 + $0x4d8] sm:$0xff]
          %v434 = vld [vmem:[%s216 + $0x4e0] sm:$0xff]
          %v435 = vld [vmem:[%s216 + $0x4e8] sm:$0xff]
          %v436 = vld [vmem:[%s216 + $0x4f0] sm:$0xff]
          %v437 = vld [vmem:[%s216 + $0x4f8] sm:$0xff]
          %v438 = vld [vmem:[%s216 + $0x500] sm:$0xff]
          %v439 = vld [vmem:[%s216 + $0x508] sm:$0xff]
          %v440 = vld [vmem:[%s216 + $0x510] sm:$0xff]
          %v441 = vld [vmem:[%s216 + $0x518] sm:$0xff]
          %v442 = vld [vmem:[%s216 + $0x520] sm:$0xff]
          %v443 = vld [vmem:[%s216 + $0x528] sm:$0xff]
          %v444 = vld [vmem:[%s216 + $0x530] sm:$0xff]
          %v445 = vld [vmem:[%s216 + $0x538] sm:$0xff]
          %v446 = vld [vmem:[%s216 + $0x540] sm:$0xff]
          %v447 = vld [vmem:[%s216 + $0x548] sm:$0xff]
          %v448 = vld [vmem:[%s216 + $0x550] sm:$0xff]
          %v449 = vld [vmem:[%s216 + $0x558] sm:$0xff]
          %v450 = vld [vmem:[%s216 + $0x560] sm:$0xff]
          %v451 = vld [vmem:[%s216 + $0x568] sm:$0xff]
          %v452 = vld [vmem:[%s216 + $0x570] sm:$0xff]
          %v453 = vld [vmem:[%s216 + $0x578] sm:$0xff]
          %v454 = vld [vmem:[%s216 + $0x580] sm:$0xff]
          %v455 = vld [vmem:[%s216 + $0x588] sm:$0xff]
          %v456 = vld [vmem:[%s216 + $0x590] sm:$0xff]
          %v457 = vld [vmem:[%s216 + $0x598] sm:$0xff]
          %v458 = vld [vmem:[%s216 + $0x5a0] sm:$0xff]
          %v459 = vld [vmem:[%s216 + $0x5a8] sm:$0xff]
          %v460 = vld [vmem:[%s216 + $0x5b0] sm:$0xff]
          %v461 = vld [vmem:[%s216 + $0x5b8] sm:$0xff]
          %v462 = vld [vmem:[%s216 + $0x5c0] sm:$0xff]
          %v463 = vld [vmem:[%s216 + $0x5c8] sm:$0xff]
          %v464 = vld [vmem:[%s216 + $0x5d0] sm:$0xff]
          %v465 = vld [vmem:[%s216 + $0x5d8] sm:$0xff]
          %v466 = vld [vmem:[%s216 + $0x5e0] sm:$0xff]
          %v467 = vld [vmem:[%s216 + $0x5e8] sm:$0xff]
          %v468 = vld [vmem:[%s216 + $0x5f0] sm:$0xff]
          %v469 = vld [vmem:[%s216 + $0x5f8] sm:$0xff]
          %v470 = vld [vmem:[%s216 + $0x600] sm:$0xff]
          %v471 = vld [vmem:[%s216 + $0x608] sm:$0xff]
          %v472 = vld [vmem:[%s216 + $0x610] sm:$0xff]
          %v473 = vld [vmem:[%s216 + $0x618] sm:$0xff]
          %v474 = vld [vmem:[%s216 + $0x620] sm:$0xff]
          %v475 = vld [vmem:[%s216 + $0x628] sm:$0xff]
          %v476 = vld [vmem:[%s216 + $0x630] sm:$0xff]
          %v477 = vld [vmem:[%s216 + $0x638] sm:$0xff]
          %v478 = vld [vmem:[%s216 + $0x640] sm:$0xff]
          %v479 = vld [vmem:[%s216 + $0x648] sm:$0xff]
          %v480 = vld [vmem:[%s216 + $0x650] sm:$0xff]
          %v481 = vld [vmem:[%s216 + $0x658] sm:$0xff]
          %v482 = vld [vmem:[%s216 + $0x660] sm:$0xff]
          %v483 = vld [vmem:[%s216 + $0x668] sm:$0xff]
          %v484 = vld [vmem:[%s216 + $0x670] sm:$0xff]
          %v485 = vld [vmem:[%s216 + $0x678] sm:$0xff]
          %v486 = vld [vmem:[%s216 + $0x680] sm:$0xff]
          %v487 = vld [vmem:[%s216 + $0x688] sm:$0xff]
          %v488 = vld [vmem:[%s216 + $0x690] sm:$0xff]
          %v489 = vld [vmem:[%s216 + $0x698] sm:$0xff]
          %v490 = vld [vmem:[%s216 + $0x6a0] sm:$0xff]
          %v491 = vld [vmem:[%s216 + $0x6a8] sm:$0xff]
          %v492 = vld [vmem:[%s216 + $0x6b0] sm:$0xff]
          %v493 = vld [vmem:[%s216 + $0x6b8] sm:$0xff]
          %v494 = vld [vmem:[%s216 + $0x6c0] sm:$0xff]
          %v495 = vld [vmem:[%s216 + $0x6c8] sm:$0xff]
          %v496 = vld [vmem:[%s216 + $0x6d0] sm:$0xff]
          %v497 = vld [vmem:[%s216 + $0x6d8] sm:$0xff]
          %v498 = vld [vmem:[%s216 + $0x6e0] sm:$0xff]
          %v499 = vld [vmem:[%s216 + $0x6e8] sm:$0xff]
          %v500 = vld [vmem:[%s216 + $0x6f0] sm:$0xff]
          %v501 = vld [vmem:[%s216 + $0x6f8] sm:$0xff]
          %v502 = vld [vmem:[%s216 + $0x700] sm:$0xff]
          %v503 = vld [vmem:[%s216 + $0x708] sm:$0xff]
          %v504 = vld [vmem:[%s216 + $0x710] sm:$0xff]
          %v505 = vld [vmem:[%s216 + $0x718] sm:$0xff]
          %v506 = vld [vmem:[%s216 + $0x720] sm:$0xff]
          %v507 = vld [vmem:[%s216 + $0x728] sm:$0xff]
          %v508 = vld [vmem:[%s216 + $0x730] sm:$0xff]
          %v509 = vld [vmem:[%s216 + $0x738] sm:$0xff]
          %v510 = vld [vmem:[%s216 + $0x740] sm:$0xff]
          %v511 = vld [vmem:[%s216 + $0x748] sm:$0xff]
          %v512 = vld [vmem:[%s216 + $0x750] sm:$0xff]
          %v513 = vld [vmem:[%s216 + $0x758] sm:$0xff]
          %v514 = vld [vmem:[%s216 + $0x760] sm:$0xff]
          %v515 = vld [vmem:[%s216 + $0x768] sm:$0xff]
          %v516 = vld [vmem:[%s216 + $0x770] sm:$0xff]
          %v517 = vld [vmem:[%s216 + $0x778] sm:$0xff]
          %v518 = vld [vmem:[%s216 + $0x780] sm:$0xff]
          %v519 = vld [vmem:[%s216 + $0x788] sm:$0xff]
          %v520 = vld [vmem:[%s216 + $0x790] sm:$0xff]
          %v521 = vld [vmem:[%s216 + $0x798] sm:$0xff]
          %v522 = vld [vmem:[%s216 + $0x7a0] sm:$0xff]
          %v523 = vld [vmem:[%s216 + $0x7a8] sm:$0xff]
          %v524 = vld [vmem:[%s216 + $0x7b0] sm:$0xff]
          %v525 = vld [vmem:[%s216 + $0x7b8] sm:$0xff]
          %v526 = vld [vmem:[%s216 + $0x7c0] sm:$0xff]
          %v527 = vld [vmem:[%s216 + $0x7c8] sm:$0xff]
          %v528 = vld [vmem:[%s216 + $0x7d0] sm:$0xff]
          %v529 = vld [vmem:[%s216 + $0x7d8] sm:$0xff]
          %v530 = vld [vmem:[%s216 + $0x7e0] sm:$0xff]
          %v531 = vld [vmem:[%s216 + $0x7e8] sm:$0xff]
          %v532 = vld [vmem:[%s216 + $0x7f0] sm:$0xff]
          %v533 = vld [vmem:[%s216 + $0x7f8] sm:$0xff]
          %534 = vst [vmem:[%s250] sm:$0xff] %v278
          %535 = vst [vmem:[%s250 + $0x8] sm:$0xff] %v279
          %536 = vst [vmem:[%s250 + $0x10] sm:$0xff] %v280
          %537 = vst [vmem:[%s250 + $0x18] sm:$0xff] %v281
          %538 = vst [vmem:[%s250 + $0x20] sm:$0xff] %v282
          %539 = vst [vmem:[%s250 + $0x28] sm:$0xff] %v283
          %540 = vst [vmem:[%s250 + $0x30] sm:$0xff] %v284
          %541 = vst [vmem:[%s250 + $0x38] sm:$0xff] %v285
          %542 = vst [vmem:[%s250 + $0x40] sm:$0xff] %v286
          %543 = vst [vmem:[%s250 + $0x48] sm:$0xff] %v287
          %544 = vst [vmem:[%s250 + $0x50] sm:$0xff] %v288
          %545 = vst [vmem:[%s250 + $0x58] sm:$0xff] %v289
          %546 = vst [vmem:[%s250 + $0x60] sm:$0xff] %v290
          %547 = vst [vmem:[%s250 + $0x68] sm:$0xff] %v291
          %548 = vst [vmem:[%s250 + $0x70] sm:$0xff] %v292
          %549 = vst [vmem:[%s250 + $0x78] sm:$0xff] %v293
          %550 = vst [vmem:[%s250 + $0x80] sm:$0xff] %v294
          %551 = vst [vmem:[%s250 + $0x88] sm:$0xff] %v295
          %552 = vst [vmem:[%s250 + $0x90] sm:$0xff] %v296
          %553 = vst [vmem:[%s250 + $0x98] sm:$0xff] %v297
          %554 = vst [vmem:[%s250 + $0xa0] sm:$0xff] %v298
          %555 = vst [vmem:[%s250 + $0xa8] sm:$0xff] %v299
          %556 = vst [vmem:[%s250 + $0xb0] sm:$0xff] %v300
          %557 = vst [vmem:[%s250 + $0xb8] sm:$0xff] %v301
          %558 = vst [vmem:[%s250 + $0xc0] sm:$0xff] %v302
          %559 = vst [vmem:[%s250 + $0xc8] sm:$0xff] %v303
          %560 = vst [vmem:[%s250 + $0xd0] sm:$0xff] %v304
          %561 = vst [vmem:[%s250 + $0xd8] sm:$0xff] %v305
          %562 = vst [vmem:[%s250 + $0xe0] sm:$0xff] %v306
          %563 = vst [vmem:[%s250 + $0xe8] sm:$0xff] %v307
          %564 = vst [vmem:[%s250 + $0xf0] sm:$0xff] %v308
          %565 = vst [vmem:[%s250 + $0xf8] sm:$0xff] %v309
          %566 = vst [vmem:[%s250 + $0x100] sm:$0xff] %v310
          %567 = vst [vmem:[%s250 + $0x108] sm:$0xff] %v311
          %568 = vst [vmem:[%s250 + $0x110] sm:$0xff] %v312
          %569 = vst [vmem:[%s250 + $0x118] sm:$0xff] %v313
          %570 = vst [vmem:[%s250 + $0x120] sm:$0xff] %v314
          %571 = vst [vmem:[%s250 + $0x128] sm:$0xff] %v315
          %572 = vst [vmem:[%s250 + $0x130] sm:$0xff] %v316
          %573 = vst [vmem:[%s250 + $0x138] sm:$0xff] %v317
          %574 = vst [vmem:[%s250 + $0x140] sm:$0xff] %v318
          %575 = vst [vmem:[%s250 + $0x148] sm:$0xff] %v319
          %576 = vst [vmem:[%s250 + $0x150] sm:$0xff] %v320
          %577 = vst [vmem:[%s250 + $0x158] sm:$0xff] %v321
          %578 = vst [vmem:[%s250 + $0x160] sm:$0xff] %v322
          %579 = vst [vmem:[%s250 + $0x168] sm:$0xff] %v323
          %580 = vst [vmem:[%s250 + $0x170] sm:$0xff] %v324
          %581 = vst [vmem:[%s250 + $0x178] sm:$0xff] %v325
          %582 = vst [vmem:[%s250 + $0x180] sm:$0xff] %v326
          %583 = vst [vmem:[%s250 + $0x188] sm:$0xff] %v327
          %584 = vst [vmem:[%s250 + $0x190] sm:$0xff] %v328
          %585 = vst [vmem:[%s250 + $0x198] sm:$0xff] %v329
          %586 = vst [vmem:[%s250 + $0x1a0] sm:$0xff] %v330
          %587 = vst [vmem:[%s250 + $0x1a8] sm:$0xff] %v331
          %588 = vst [vmem:[%s250 + $0x1b0] sm:$0xff] %v332
          %589 = vst [vmem:[%s250 + $0x1b8] sm:$0xff] %v333
          %590 = vst [vmem:[%s250 + $0x1c0] sm:$0xff] %v334
          %591 = vst [vmem:[%s250 + $0x1c8] sm:$0xff] %v335
          %592 = vst [vmem:[%s250 + $0x1d0] sm:$0xff] %v336
          %593 = vst [vmem:[%s250 + $0x1d8] sm:$0xff] %v337
          %594 = vst [vmem:[%s250 + $0x1e0] sm:$0xff] %v338
          %595 = vst [vmem:[%s250 + $0x1e8] sm:$0xff] %v339
          %596 = vst [vmem:[%s250 + $0x1f0] sm:$0xff] %v340
          %597 = vst [vmem:[%s250 + $0x1f8] sm:$0xff] %v341
          %598 = vst [vmem:[%s250 + $0x200] sm:$0xff] %v342
          %599 = vst [vmem:[%s250 + $0x208] sm:$0xff] %v343
          %600 = vst [vmem:[%s250 + $0x210] sm:$0xff] %v344
          %601 = vst [vmem:[%s250 + $0x218] sm:$0xff] %v345
          %602 = vst [vmem:[%s250 + $0x220] sm:$0xff] %v346
          %603 = vst [vmem:[%s250 + $0x228] sm:$0xff] %v347
          %604 = vst [vmem:[%s250 + $0x230] sm:$0xff] %v348
          %605 = vst [vmem:[%s250 + $0x238] sm:$0xff] %v349
          %606 = vst [vmem:[%s250 + $0x240] sm:$0xff] %v350
          %607 = vst [vmem:[%s250 + $0x248] sm:$0xff] %v351
          %608 = vst [vmem:[%s250 + $0x250] sm:$0xff] %v352
          %609 = vst [vmem:[%s250 + $0x258] sm:$0xff] %v353
          %610 = vst [vmem:[%s250 + $0x260] sm:$0xff] %v354
          %611 = vst [vmem:[%s250 + $0x268] sm:$0xff] %v355
          %612 = vst [vmem:[%s250 + $0x270] sm:$0xff] %v356
          %613 = vst [vmem:[%s250 + $0x278] sm:$0xff] %v357
          %614 = vst [vmem:[%s250 + $0x280] sm:$0xff] %v358
          %615 = vst [vmem:[%s250 + $0x288] sm:$0xff] %v359
          %616 = vst [vmem:[%s250 + $0x290] sm:$0xff] %v360
          %617 = vst [vmem:[%s250 + $0x298] sm:$0xff] %v361
          %618 = vst [vmem:[%s250 + $0x2a0] sm:$0xff] %v362
          %619 = vst [vmem:[%s250 + $0x2a8] sm:$0xff] %v363
          %620 = vst [vmem:[%s250 + $0x2b0] sm:$0xff] %v364
          %621 = vst [vmem:[%s250 + $0x2b8] sm:$0xff] %v365
          %622 = vst [vmem:[%s250 + $0x2c0] sm:$0xff] %v366
          %623 = vst [vmem:[%s250 + $0x2c8] sm:$0xff] %v367
          %624 = vst [vmem:[%s250 + $0x2d0] sm:$0xff] %v368
          %625 = vst [vmem:[%s250 + $0x2d8] sm:$0xff] %v369
          %626 = vst [vmem:[%s250 + $0x2e0] sm:$0xff] %v370
          %627 = vst [vmem:[%s250 + $0x2e8] sm:$0xff] %v371
          %628 = vst [vmem:[%s250 + $0x2f0] sm:$0xff] %v372
          %629 = vst [vmem:[%s250 + $0x2f8] sm:$0xff] %v373
          %630 = vst [vmem:[%s250 + $0x300] sm:$0xff] %v374
          %631 = vst [vmem:[%s250 + $0x308] sm:$0xff] %v375
          %632 = vst [vmem:[%s250 + $0x310] sm:$0xff] %v376
          %633 = vst [vmem:[%s250 + $0x318] sm:$0xff] %v377
          %634 = vst [vmem:[%s250 + $0x320] sm:$0xff] %v378
          %635 = vst [vmem:[%s250 + $0x328] sm:$0xff] %v379
          %636 = vst [vmem:[%s250 + $0x330] sm:$0xff] %v380
          %637 = vst [vmem:[%s250 + $0x338] sm:$0xff] %v381
          %638 = vst [vmem:[%s250 + $0x340] sm:$0xff] %v382
          %639 = vst [vmem:[%s250 + $0x348] sm:$0xff] %v383
          %640 = vst [vmem:[%s250 + $0x350] sm:$0xff] %v384
          %641 = vst [vmem:[%s250 + $0x358] sm:$0xff] %v385
          %642 = vst [vmem:[%s250 + $0x360] sm:$0xff] %v386
          %643 = vst [vmem:[%s250 + $0x368] sm:$0xff] %v387
          %644 = vst [vmem:[%s250 + $0x370] sm:$0xff] %v388
          %645 = vst [vmem:[%s250 + $0x378] sm:$0xff] %v389
          %646 = vst [vmem:[%s250 + $0x380] sm:$0xff] %v390
          %647 = vst [vmem:[%s250 + $0x388] sm:$0xff] %v391
          %648 = vst [vmem:[%s250 + $0x390] sm:$0xff] %v392
          %649 = vst [vmem:[%s250 + $0x398] sm:$0xff] %v393
          %650 = vst [vmem:[%s250 + $0x3a0] sm:$0xff] %v394
          %651 = vst [vmem:[%s250 + $0x3a8] sm:$0xff] %v395
          %652 = vst [vmem:[%s250 + $0x3b0] sm:$0xff] %v396
          %653 = vst [vmem:[%s250 + $0x3b8] sm:$0xff] %v397
          %654 = vst [vmem:[%s250 + $0x3c0] sm:$0xff] %v398
          %655 = vst [vmem:[%s250 + $0x3c8] sm:$0xff] %v399
          %656 = vst [vmem:[%s250 + $0x3d0] sm:$0xff] %v400
          %657 = vst [vmem:[%s250 + $0x3d8] sm:$0xff] %v401
          %658 = vst [vmem:[%s250 + $0x3e0] sm:$0xff] %v402
          %659 = vst [vmem:[%s250 + $0x3e8] sm:$0xff] %v403
          %660 = vst [vmem:[%s250 + $0x3f0] sm:$0xff] %v404
          %661 = vst [vmem:[%s250 + $0x3f8] sm:$0xff] %v405
          %662 = vst [vmem:[%s250 + $0x400] sm:$0xff] %v406
          %663 = vst [vmem:[%s250 + $0x408] sm:$0xff] %v407
          %664 = vst [vmem:[%s250 + $0x410] sm:$0xff] %v408
          %665 = vst [vmem:[%s250 + $0x418] sm:$0xff] %v409
          %666 = vst [vmem:[%s250 + $0x420] sm:$0xff] %v410
          %667 = vst [vmem:[%s250 + $0x428] sm:$0xff] %v411
          %668 = vst [vmem:[%s250 + $0x430] sm:$0xff] %v412
          %669 = vst [vmem:[%s250 + $0x438] sm:$0xff] %v413
          %670 = vst [vmem:[%s250 + $0x440] sm:$0xff] %v414
          %671 = vst [vmem:[%s250 + $0x448] sm:$0xff] %v415
          %672 = vst [vmem:[%s250 + $0x450] sm:$0xff] %v416
          %673 = vst [vmem:[%s250 + $0x458] sm:$0xff] %v417
          %674 = vst [vmem:[%s250 + $0x460] sm:$0xff] %v418
          %675 = vst [vmem:[%s250 + $0x468] sm:$0xff] %v419
          %676 = vst [vmem:[%s250 + $0x470] sm:$0xff] %v420
          %677 = vst [vmem:[%s250 + $0x478] sm:$0xff] %v421
          %678 = vst [vmem:[%s250 + $0x480] sm:$0xff] %v422
          %679 = vst [vmem:[%s250 + $0x488] sm:$0xff] %v423
          %680 = vst [vmem:[%s250 + $0x490] sm:$0xff] %v424
          %681 = vst [vmem:[%s250 + $0x498] sm:$0xff] %v425
          %682 = vst [vmem:[%s250 + $0x4a0] sm:$0xff] %v426
          %683 = vst [vmem:[%s250 + $0x4a8] sm:$0xff] %v427
          %684 = vst [vmem:[%s250 + $0x4b0] sm:$0xff] %v428
          %685 = vst [vmem:[%s250 + $0x4b8] sm:$0xff] %v429
          %686 = vst [vmem:[%s250 + $0x4c0] sm:$0xff] %v430
          %687 = vst [vmem:[%s250 + $0x4c8] sm:$0xff] %v431
          %688 = vst [vmem:[%s250 + $0x4d0] sm:$0xff] %v432
          %689 = vst [vmem:[%s250 + $0x4d8] sm:$0xff] %v433
          %690 = vst [vmem:[%s250 + $0x4e0] sm:$0xff] %v434
          %691 = vst [vmem:[%s250 + $0x4e8] sm:$0xff] %v435
          %692 = vst [vmem:[%s250 + $0x4f0] sm:$0xff] %v436
          %693 = vst [vmem:[%s250 + $0x4f8] sm:$0xff] %v437
          %694 = vst [vmem:[%s250 + $0x500] sm:$0xff] %v438
          %695 = vst [vmem:[%s250 + $0x508] sm:$0xff] %v439
          %696 = vst [vmem:[%s250 + $0x510] sm:$0xff] %v440
          %697 = vst [vmem:[%s250 + $0x518] sm:$0xff] %v441
          %698 = vst [vmem:[%s250 + $0x520] sm:$0xff] %v442
          %699 = vst [vmem:[%s250 + $0x528] sm:$0xff] %v443
          %700 = vst [vmem:[%s250 + $0x530] sm:$0xff] %v444
          %701 = vst [vmem:[%s250 + $0x538] sm:$0xff] %v445
          %702 = vst [vmem:[%s250 + $0x540] sm:$0xff] %v446
          %703 = vst [vmem:[%s250 + $0x548] sm:$0xff] %v447
          %704 = vst [vmem:[%s250 + $0x550] sm:$0xff] %v448
          %705 = vst [vmem:[%s250 + $0x558] sm:$0xff] %v449
          %706 = vst [vmem:[%s250 + $0x560] sm:$0xff] %v450
          %707 = vst [vmem:[%s250 + $0x568] sm:$0xff] %v451
          %708 = vst [vmem:[%s250 + $0x570] sm:$0xff] %v452
          %709 = vst [vmem:[%s250 + $0x578] sm:$0xff] %v453
          %710 = vst [vmem:[%s250 + $0x580] sm:$0xff] %v454
          %711 = vst [vmem:[%s250 + $0x588] sm:$0xff] %v455
          %712 = vst [vmem:[%s250 + $0x590] sm:$0xff] %v456
          %713 = vst [vmem:[%s250 + $0x598] sm:$0xff] %v457
          %714 = vst [vmem:[%s250 + $0x5a0] sm:$0xff] %v458
          %715 = vst [vmem:[%s250 + $0x5a8] sm:$0xff] %v459
          %716 = vst [vmem:[%s250 + $0x5b0] sm:$0xff] %v460
          %717 = vst [vmem:[%s250 + $0x5b8] sm:$0xff] %v461
          %718 = vst [vmem:[%s250 + $0x5c0] sm:$0xff] %v462
          %719 = vst [vmem:[%s250 + $0x5c8] sm:$0xff] %v463
          %720 = vst [vmem:[%s250 + $0x5d0] sm:$0xff] %v464
          %721 = vst [vmem:[%s250 + $0x5d8] sm:$0xff] %v465
          %722 = vst [vmem:[%s250 + $0x5e0] sm:$0xff] %v466
          %723 = vst [vmem:[%s250 + $0x5e8] sm:$0xff] %v467
          %724 = vst [vmem:[%s250 + $0x5f0] sm:$0xff] %v468
          %725 = vst [vmem:[%s250 + $0x5f8] sm:$0xff] %v469
          %726 = vst [vmem:[%s250 + $0x600] sm:$0xff] %v470
          %727 = vst [vmem:[%s250 + $0x608] sm:$0xff] %v471
          %728 = vst [vmem:[%s250 + $0x610] sm:$0xff] %v472
          %729 = vst [vmem:[%s250 + $0x618] sm:$0xff] %v473
          %730 = vst [vmem:[%s250 + $0x620] sm:$0xff] %v474
          %731 = vst [vmem:[%s250 + $0x628] sm:$0xff] %v475
          %732 = vst [vmem:[%s250 + $0x630] sm:$0xff] %v476
          %733 = vst [vmem:[%s250 + $0x638] sm:$0xff] %v477
          %734 = vst [vmem:[%s250 + $0x640] sm:$0xff] %v478
          %735 = vst [vmem:[%s250 + $0x648] sm:$0xff] %v479
          %736 = vst [vmem:[%s250 + $0x650] sm:$0xff] %v480
          %737 = vst [vmem:[%s250 + $0x658] sm:$0xff] %v481
          %738 = vst [vmem:[%s250 + $0x660] sm:$0xff] %v482
          %739 = vst [vmem:[%s250 + $0x668] sm:$0xff] %v483
          %740 = vst [vmem:[%s250 + $0x670] sm:$0xff] %v484
          %741 = vst [vmem:[%s250 + $0x678] sm:$0xff] %v485
          %742 = vst [vmem:[%s250 + $0x680] sm:$0xff] %v486
          %743 = vst [vmem:[%s250 + $0x688] sm:$0xff] %v487
          %744 = vst [vmem:[%s250 + $0x690] sm:$0xff] %v488
          %745 = vst [vmem:[%s250 + $0x698] sm:$0xff] %v489
          %746 = vst [vmem:[%s250 + $0x6a0] sm:$0xff] %v490
          %747 = vst [vmem:[%s250 + $0x6a8] sm:$0xff] %v491
          %748 = vst [vmem:[%s250 + $0x6b0] sm:$0xff] %v492
          %749 = vst [vmem:[%s250 + $0x6b8] sm:$0xff] %v493
          %750 = vst [vmem:[%s250 + $0x6c0] sm:$0xff] %v494
          %751 = vst [vmem:[%s250 + $0x6c8] sm:$0xff] %v495
          %752 = vst [vmem:[%s250 + $0x6d0] sm:$0xff] %v496
          %753 = vst [vmem:[%s250 + $0x6d8] sm:$0xff] %v497
          %754 = vst [vmem:[%s250 + $0x6e0] sm:$0xff] %v498
          %755 = vst [vmem:[%s250 + $0x6e8] sm:$0xff] %v499
          %756 = vst [vmem:[%s250 + $0x6f0] sm:$0xff] %v500
          %757 = vst [vmem:[%s250 + $0x6f8] sm:$0xff] %v501
          %758 = vst [vmem:[%s250 + $0x700] sm:$0xff] %v502
          %759 = vst [vmem:[%s250 + $0x708] sm:$0xff] %v503
          %760 = vst [vmem:[%s250 + $0x710] sm:$0xff] %v504
          %761 = vst [vmem:[%s250 + $0x718] sm:$0xff] %v505
          %762 = vst [vmem:[%s250 + $0x720] sm:$0xff] %v506
          %763 = vst [vmem:[%s250 + $0x728] sm:$0xff] %v507
          %764 = vst [vmem:[%s250 + $0x730] sm:$0xff] %v508
          %765 = vst [vmem:[%s250 + $0x738] sm:$0xff] %v509
          %766 = vst [vmem:[%s250 + $0x740] sm:$0xff] %v510
          %767 = vst [vmem:[%s250 + $0x748] sm:$0xff] %v511
          %768 = vst [vmem:[%s250 + $0x750] sm:$0xff] %v512
          %769 = vst [vmem:[%s250 + $0x758] sm:$0xff] %v513
          %770 = vst [vmem:[%s250 + $0x760] sm:$0xff] %v514
          %771 = vst [vmem:[%s250 + $0x768] sm:$0xff] %v515
          %772 = vst [vmem:[%s250 + $0x770] sm:$0xff] %v516
          %773 = vst [vmem:[%s250 + $0x778] sm:$0xff] %v517
          %774 = vst [vmem:[%s250 + $0x780] sm:$0xff] %v518
          %775 = vst [vmem:[%s250 + $0x788] sm:$0xff] %v519
          %776 = vst [vmem:[%s250 + $0x790] sm:$0xff] %v520
          %777 = vst [vmem:[%s250 + $0x798] sm:$0xff] %v521
          %778 = vst [vmem:[%s250 + $0x7a0] sm:$0xff] %v522
          %779 = vst [vmem:[%s250 + $0x7a8] sm:$0xff] %v523
          %780 = vst [vmem:[%s250 + $0x7b0] sm:$0xff] %v524
          %781 = vst [vmem:[%s250 + $0x7b8] sm:$0xff] %v525
          %782 = vst [vmem:[%s250 + $0x7c0] sm:$0xff] %v526
          %783 = vst [vmem:[%s250 + $0x7c8] sm:$0xff] %v527
          %784 = vst [vmem:[%s250 + $0x7d0] sm:$0xff] %v528
          %785 = vst [vmem:[%s250 + $0x7d8] sm:$0xff] %v529
          %786 = vst [vmem:[%s250 + $0x7e0] sm:$0xff] %v530
          %787 = vst [vmem:[%s250 + $0x7e8] sm:$0xff] %v531
          %788 = vst [vmem:[%s250 + $0x7f0] sm:$0xff] %v532
          %789 = vst [vmem:[%s250 + $0x7f8] sm:$0xff] %v533
        $region40: #{tpu_custom_call.1} parent=27 // pred_fallthru
          _
        %p790 = scmp.ge.s32.totalorder %s27, 1
        // Predicated region
        $region41: #{tpu_custom_call.1} parent=27 // pred_check
          %p791 = pneg %p790
        $region42: #{tpu_custom_call.1} parent=27 // pred_check_branch
          %793 = sbr.rel (%p791) target = $region44
        $region43: #{tpu_custom_call.1} parent=27 // pred_region
          %v794 = vld [vmem:[%s225] sm:$0xf]
          %v795 = vld [vmem:[%s225 + $0x4] sm:$0xf]
          %v796 = vld [vmem:[%s225 + $0x8] sm:$0xf]
          %v797 = vld [vmem:[%s225 + $0xc] sm:$0xf]
          %v798 = vld [vmem:[%s225 + $0x10] sm:$0xf]
          %v799 = vld [vmem:[%s225 + $0x14] sm:$0xf]
          %v800 = vld [vmem:[%s225 + $0x18] sm:$0xf]
          %v801 = vld [vmem:[%s225 + $0x1c] sm:$0xf]
          %v802 = vld [vmem:[%s225 + $0x20] sm:$0xf]
          %v803 = vld [vmem:[%s225 + $0x24] sm:$0xf]
          %v804 = vld [vmem:[%s225 + $0x28] sm:$0xf]
          %v805 = vld [vmem:[%s225 + $0x2c] sm:$0xf]
          %v806 = vld [vmem:[%s225 + $0x30] sm:$0xf]
          %v807 = vld [vmem:[%s225 + $0x34] sm:$0xf]
          %v808 = vld [vmem:[%s225 + $0x38] sm:$0xf]
          %v809 = vld [vmem:[%s225 + $0x3c] sm:$0xf]
          %v810 = vld [vmem:[%s225 + $0x40] sm:$0xf]
          %v811 = vld [vmem:[%s225 + $0x44] sm:$0xf]
          %v812 = vld [vmem:[%s225 + $0x48] sm:$0xf]
          %v813 = vld [vmem:[%s225 + $0x4c] sm:$0xf]
          %v814 = vld [vmem:[%s225 + $0x50] sm:$0xf]
          %v815 = vld [vmem:[%s225 + $0x54] sm:$0xf]
          %v816 = vld [vmem:[%s225 + $0x58] sm:$0xf]
          %v817 = vld [vmem:[%s225 + $0x5c] sm:$0xf]
          %v818 = vld [vmem:[%s225 + $0x60] sm:$0xf]
          %v819 = vld [vmem:[%s225 + $0x64] sm:$0xf]
          %v820 = vld [vmem:[%s225 + $0x68] sm:$0xf]
          %v821 = vld [vmem:[%s225 + $0x6c] sm:$0xf]
          %v822 = vld [vmem:[%s225 + $0x70] sm:$0xf]
          %v823 = vld [vmem:[%s225 + $0x74] sm:$0xf]
          %v824 = vld [vmem:[%s225 + $0x78] sm:$0xf]
          %v825 = vld [vmem:[%s225 + $0x7c] sm:$0xf]
          %v826 = vld [vmem:[%s225 + $0x80] sm:$0xf]
          %v827 = vld [vmem:[%s225 + $0x84] sm:$0xf]
          %v828 = vld [vmem:[%s225 + $0x88] sm:$0xf]
          %v829 = vld [vmem:[%s225 + $0x8c] sm:$0xf]
          %v830 = vld [vmem:[%s225 + $0x90] sm:$0xf]
          %v831 = vld [vmem:[%s225 + $0x94] sm:$0xf]
          %v832 = vld [vmem:[%s225 + $0x98] sm:$0xf]
          %v833 = vld [vmem:[%s225 + $0x9c] sm:$0xf]
          %v834 = vld [vmem:[%s225 + $0xa0] sm:$0xf]
          %v835 = vld [vmem:[%s225 + $0xa4] sm:$0xf]
          %v836 = vld [vmem:[%s225 + $0xa8] sm:$0xf]
          %v837 = vld [vmem:[%s225 + $0xac] sm:$0xf]
          %v838 = vld [vmem:[%s225 + $0xb0] sm:$0xf]
          %v839 = vld [vmem:[%s225 + $0xb4] sm:$0xf]
          %v840 = vld [vmem:[%s225 + $0xb8] sm:$0xf]
          %v841 = vld [vmem:[%s225 + $0xbc] sm:$0xf]
          %v842 = vld [vmem:[%s225 + $0xc0] sm:$0xf]
          %v843 = vld [vmem:[%s225 + $0xc4] sm:$0xf]
          %v844 = vld [vmem:[%s225 + $0xc8] sm:$0xf]
          %v845 = vld [vmem:[%s225 + $0xcc] sm:$0xf]
          %v846 = vld [vmem:[%s225 + $0xd0] sm:$0xf]
          %v847 = vld [vmem:[%s225 + $0xd4] sm:$0xf]
          %v848 = vld [vmem:[%s225 + $0xd8] sm:$0xf]
          %v849 = vld [vmem:[%s225 + $0xdc] sm:$0xf]
          %v850 = vld [vmem:[%s225 + $0xe0] sm:$0xf]
          %v851 = vld [vmem:[%s225 + $0xe4] sm:$0xf]
          %v852 = vld [vmem:[%s225 + $0xe8] sm:$0xf]
          %v853 = vld [vmem:[%s225 + $0xec] sm:$0xf]
          %v854 = vld [vmem:[%s225 + $0xf0] sm:$0xf]
          %v855 = vld [vmem:[%s225 + $0xf4] sm:$0xf]
          %v856 = vld [vmem:[%s225 + $0xf8] sm:$0xf]
          %v857 = vld [vmem:[%s225 + $0xfc] sm:$0xf]
          %v858 = vld [vmem:[%s225 + $0x100] sm:$0xf]
          %v859 = vld [vmem:[%s225 + $0x104] sm:$0xf]
          %v860 = vld [vmem:[%s225 + $0x108] sm:$0xf]
          %v861 = vld [vmem:[%s225 + $0x10c] sm:$0xf]
          %v862 = vld [vmem:[%s225 + $0x110] sm:$0xf]
          %v863 = vld [vmem:[%s225 + $0x114] sm:$0xf]
          %v864 = vld [vmem:[%s225 + $0x118] sm:$0xf]
          %v865 = vld [vmem:[%s225 + $0x11c] sm:$0xf]
          %v866 = vld [vmem:[%s225 + $0x120] sm:$0xf]
          %v867 = vld [vmem:[%s225 + $0x124] sm:$0xf]
          %v868 = vld [vmem:[%s225 + $0x128] sm:$0xf]
          %v869 = vld [vmem:[%s225 + $0x12c] sm:$0xf]
          %v870 = vld [vmem:[%s225 + $0x130] sm:$0xf]
          %v871 = vld [vmem:[%s225 + $0x134] sm:$0xf]
          %v872 = vld [vmem:[%s225 + $0x138] sm:$0xf]
          %v873 = vld [vmem:[%s225 + $0x13c] sm:$0xf]
          %v874 = vld [vmem:[%s225 + $0x140] sm:$0xf]
          %v875 = vld [vmem:[%s225 + $0x144] sm:$0xf]
          %v876 = vld [vmem:[%s225 + $0x148] sm:$0xf]
          %v877 = vld [vmem:[%s225 + $0x14c] sm:$0xf]
          %v878 = vld [vmem:[%s225 + $0x150] sm:$0xf]
          %v879 = vld [vmem:[%s225 + $0x154] sm:$0xf]
          %v880 = vld [vmem:[%s225 + $0x158] sm:$0xf]
          %v881 = vld [vmem:[%s225 + $0x15c] sm:$0xf]
          %v882 = vld [vmem:[%s225 + $0x160] sm:$0xf]
          %v883 = vld [vmem:[%s225 + $0x164] sm:$0xf]
          %v884 = vld [vmem:[%s225 + $0x168] sm:$0xf]
          %v885 = vld [vmem:[%s225 + $0x16c] sm:$0xf]
          %v886 = vld [vmem:[%s225 + $0x170] sm:$0xf]
          %v887 = vld [vmem:[%s225 + $0x174] sm:$0xf]
          %v888 = vld [vmem:[%s225 + $0x178] sm:$0xf]
          %v889 = vld [vmem:[%s225 + $0x17c] sm:$0xf]
          %v890 = vld [vmem:[%s225 + $0x180] sm:$0xf]
          %v891 = vld [vmem:[%s225 + $0x184] sm:$0xf]
          %v892 = vld [vmem:[%s225 + $0x188] sm:$0xf]
          %v893 = vld [vmem:[%s225 + $0x18c] sm:$0xf]
          %v894 = vld [vmem:[%s225 + $0x190] sm:$0xf]
          %v895 = vld [vmem:[%s225 + $0x194] sm:$0xf]
          %v896 = vld [vmem:[%s225 + $0x198] sm:$0xf]
          %v897 = vld [vmem:[%s225 + $0x19c] sm:$0xf]
          %v898 = vld [vmem:[%s225 + $0x1a0] sm:$0xf]
          %v899 = vld [vmem:[%s225 + $0x1a4] sm:$0xf]
          %v900 = vld [vmem:[%s225 + $0x1a8] sm:$0xf]
          %v901 = vld [vmem:[%s225 + $0x1ac] sm:$0xf]
          %v902 = vld [vmem:[%s225 + $0x1b0] sm:$0xf]
          %v903 = vld [vmem:[%s225 + $0x1b4] sm:$0xf]
          %v904 = vld [vmem:[%s225 + $0x1b8] sm:$0xf]
          %v905 = vld [vmem:[%s225 + $0x1bc] sm:$0xf]
          %v906 = vld [vmem:[%s225 + $0x1c0] sm:$0xf]
          %v907 = vld [vmem:[%s225 + $0x1c4] sm:$0xf]
          %v908 = vld [vmem:[%s225 + $0x1c8] sm:$0xf]
          %v909 = vld [vmem:[%s225 + $0x1cc] sm:$0xf]
          %v910 = vld [vmem:[%s225 + $0x1d0] sm:$0xf]
          %v911 = vld [vmem:[%s225 + $0x1d4] sm:$0xf]
          %v912 = vld [vmem:[%s225 + $0x1d8] sm:$0xf]
          %v913 = vld [vmem:[%s225 + $0x1dc] sm:$0xf]
          %v914 = vld [vmem:[%s225 + $0x1e0] sm:$0xf]
          %v915 = vld [vmem:[%s225 + $0x1e4] sm:$0xf]
          %v916 = vld [vmem:[%s225 + $0x1e8] sm:$0xf]
          %v917 = vld [vmem:[%s225 + $0x1ec] sm:$0xf]
          %v918 = vld [vmem:[%s225 + $0x1f0] sm:$0xf]
          %v919 = vld [vmem:[%s225 + $0x1f4] sm:$0xf]
          %v920 = vld [vmem:[%s225 + $0x1f8] sm:$0xf]
          %v921 = vld [vmem:[%s225 + $0x1fc] sm:$0xf]
          %922 = vst [vmem:[%s250] sm:$0xf] %v794
          %923 = vst [vmem:[%s250 + $0x10] sm:$0xf] %v795
          %924 = vst [vmem:[%s250 + $0x20] sm:$0xf] %v796
          %925 = vst [vmem:[%s250 + $0x30] sm:$0xf] %v797
          %926 = vst [vmem:[%s250 + $0x40] sm:$0xf] %v798
          %927 = vst [vmem:[%s250 + $0x50] sm:$0xf] %v799
          %928 = vst [vmem:[%s250 + $0x60] sm:$0xf] %v800
          %929 = vst [vmem:[%s250 + $0x70] sm:$0xf] %v801
          %930 = vst [vmem:[%s250 + $0x80] sm:$0xf] %v802
          %931 = vst [vmem:[%s250 + $0x90] sm:$0xf] %v803
          %932 = vst [vmem:[%s250 + $0xa0] sm:$0xf] %v804
          %933 = vst [vmem:[%s250 + $0xb0] sm:$0xf] %v805
          %934 = vst [vmem:[%s250 + $0xc0] sm:$0xf] %v806
          %935 = vst [vmem:[%s250 + $0xd0] sm:$0xf] %v807
          %936 = vst [vmem:[%s250 + $0xe0] sm:$0xf] %v808
          %937 = vst [vmem:[%s250 + $0xf0] sm:$0xf] %v809
          %938 = vst [vmem:[%s250 + $0x100] sm:$0xf] %v810
          %939 = vst [vmem:[%s250 + $0x110] sm:$0xf] %v811
          %940 = vst [vmem:[%s250 + $0x120] sm:$0xf] %v812
          %941 = vst [vmem:[%s250 + $0x130] sm:$0xf] %v813
          %942 = vst [vmem:[%s250 + $0x140] sm:$0xf] %v814
          %943 = vst [vmem:[%s250 + $0x150] sm:$0xf] %v815
          %944 = vst [vmem:[%s250 + $0x160] sm:$0xf] %v816
          %945 = vst [vmem:[%s250 + $0x170] sm:$0xf] %v817
          %946 = vst [vmem:[%s250 + $0x180] sm:$0xf] %v818
          %947 = vst [vmem:[%s250 + $0x190] sm:$0xf] %v819
          %948 = vst [vmem:[%s250 + $0x1a0] sm:$0xf] %v820
          %949 = vst [vmem:[%s250 + $0x1b0] sm:$0xf] %v821
          %950 = vst [vmem:[%s250 + $0x1c0] sm:$0xf] %v822
          %951 = vst [vmem:[%s250 + $0x1d0] sm:$0xf] %v823
          %952 = vst [vmem:[%s250 + $0x1e0] sm:$0xf] %v824
          %953 = vst [vmem:[%s250 + $0x1f0] sm:$0xf] %v825
          %954 = vst [vmem:[%s250 + $0x200] sm:$0xf] %v826
          %955 = vst [vmem:[%s250 + $0x210] sm:$0xf] %v827
          %956 = vst [vmem:[%s250 + $0x220] sm:$0xf] %v828
          %957 = vst [vmem:[%s250 + $0x230] sm:$0xf] %v829
          %958 = vst [vmem:[%s250 + $0x240] sm:$0xf] %v830
          %959 = vst [vmem:[%s250 + $0x250] sm:$0xf] %v831
          %960 = vst [vmem:[%s250 + $0x260] sm:$0xf] %v832
          %961 = vst [vmem:[%s250 + $0x270] sm:$0xf] %v833
          %962 = vst [vmem:[%s250 + $0x280] sm:$0xf] %v834
          %963 = vst [vmem:[%s250 + $0x290] sm:$0xf] %v835
          %964 = vst [vmem:[%s250 + $0x2a0] sm:$0xf] %v836
          %965 = vst [vmem:[%s250 + $0x2b0] sm:$0xf] %v837
          %966 = vst [vmem:[%s250 + $0x2c0] sm:$0xf] %v838
          %967 = vst [vmem:[%s250 + $0x2d0] sm:$0xf] %v839
          %968 = vst [vmem:[%s250 + $0x2e0] sm:$0xf] %v840
          %969 = vst [vmem:[%s250 + $0x2f0] sm:$0xf] %v841
          %970 = vst [vmem:[%s250 + $0x300] sm:$0xf] %v842
          %971 = vst [vmem:[%s250 + $0x310] sm:$0xf] %v843
          %972 = vst [vmem:[%s250 + $0x320] sm:$0xf] %v844
          %973 = vst [vmem:[%s250 + $0x330] sm:$0xf] %v845
          %974 = vst [vmem:[%s250 + $0x340] sm:$0xf] %v846
          %975 = vst [vmem:[%s250 + $0x350] sm:$0xf] %v847
          %976 = vst [vmem:[%s250 + $0x360] sm:$0xf] %v848
          %977 = vst [vmem:[%s250 + $0x370] sm:$0xf] %v849
          %978 = vst [vmem:[%s250 + $0x380] sm:$0xf] %v850
          %979 = vst [vmem:[%s250 + $0x390] sm:$0xf] %v851
          %980 = vst [vmem:[%s250 + $0x3a0] sm:$0xf] %v852
          %981 = vst [vmem:[%s250 + $0x3b0] sm:$0xf] %v853
          %982 = vst [vmem:[%s250 + $0x3c0] sm:$0xf] %v854
          %983 = vst [vmem:[%s250 + $0x3d0] sm:$0xf] %v855
          %984 = vst [vmem:[%s250 + $0x3e0] sm:$0xf] %v856
          %985 = vst [vmem:[%s250 + $0x3f0] sm:$0xf] %v857
          %986 = vst [vmem:[%s250 + $0x400] sm:$0xf] %v858
          %987 = vst [vmem:[%s250 + $0x410] sm:$0xf] %v859
          %988 = vst [vmem:[%s250 + $0x420] sm:$0xf] %v860
          %989 = vst [vmem:[%s250 + $0x430] sm:$0xf] %v861
          %990 = vst [vmem:[%s250 + $0x440] sm:$0xf] %v862
          %991 = vst [vmem:[%s250 + $0x450] sm:$0xf] %v863
          %992 = vst [vmem:[%s250 + $0x460] sm:$0xf] %v864
          %993 = vst [vmem:[%s250 + $0x470] sm:$0xf] %v865
          %994 = vst [vmem:[%s250 + $0x480] sm:$0xf] %v866
          %995 = vst [vmem:[%s250 + $0x490] sm:$0xf] %v867
          %996 = vst [vmem:[%s250 + $0x4a0] sm:$0xf] %v868
          %997 = vst [vmem:[%s250 + $0x4b0] sm:$0xf] %v869
          %998 = vst [vmem:[%s250 + $0x4c0] sm:$0xf] %v870
          %999 = vst [vmem:[%s250 + $0x4d0] sm:$0xf] %v871
          %1000 = vst [vmem:[%s250 + $0x4e0] sm:$0xf] %v872
          %1001 = vst [vmem:[%s250 + $0x4f0] sm:$0xf] %v873
          %1002 = vst [vmem:[%s250 + $0x500] sm:$0xf] %v874
          %1003 = vst [vmem:[%s250 + $0x510] sm:$0xf] %v875
          %1004 = vst [vmem:[%s250 + $0x520] sm:$0xf] %v876
          %1005 = vst [vmem:[%s250 + $0x530] sm:$0xf] %v877
          %1006 = vst [vmem:[%s250 + $0x540] sm:$0xf] %v878
          %1007 = vst [vmem:[%s250 + $0x550] sm:$0xf] %v879
          %1008 = vst [vmem:[%s250 + $0x560] sm:$0xf] %v880
          %1009 = vst [vmem:[%s250 + $0x570] sm:$0xf] %v881
          %1010 = vst [vmem:[%s250 + $0x580] sm:$0xf] %v882
          %1011 = vst [vmem:[%s250 + $0x590] sm:$0xf] %v883
          %1012 = vst [vmem:[%s250 + $0x5a0] sm:$0xf] %v884
          %1013 = vst [vmem:[%s250 + $0x5b0] sm:$0xf] %v885
          %1014 = vst [vmem:[%s250 + $0x5c0] sm:$0xf] %v886
          %1015 = vst [vmem:[%s250 + $0x5d0] sm:$0xf] %v887
          %1016 = vst [vmem:[%s250 + $0x5e0] sm:$0xf] %v888
          %1017 = vst [vmem:[%s250 + $0x5f0] sm:$0xf] %v889
          %1018 = vst [vmem:[%s250 + $0x600] sm:$0xf] %v890
          %1019 = vst [vmem:[%s250 + $0x610] sm:$0xf] %v891
          %1020 = vst [vmem:[%s250 + $0x620] sm:$0xf] %v892
          %1021 = vst [vmem:[%s250 + $0x630] sm:$0xf] %v893
          %1022 = vst [vmem:[%s250 + $0x640] sm:$0xf] %v894
          %1023 = vst [vmem:[%s250 + $0x650] sm:$0xf] %v895
          %1024 = vst [vmem:[%s250 + $0x660] sm:$0xf] %v896
          %1025 = vst [vmem:[%s250 + $0x670] sm:$0xf] %v897
          %1026 = vst [vmem:[%s250 + $0x680] sm:$0xf] %v898
          %1027 = vst [vmem:[%s250 + $0x690] sm:$0xf] %v899
          %1028 = vst [vmem:[%s250 + $0x6a0] sm:$0xf] %v900
          %1029 = vst [vmem:[%s250 + $0x6b0] sm:$0xf] %v901
          %1030 = vst [vmem:[%s250 + $0x6c0] sm:$0xf] %v902
          %1031 = vst [vmem:[%s250 + $0x6d0] sm:$0xf] %v903
          %1032 = vst [vmem:[%s250 + $0x6e0] sm:$0xf] %v904
          %1033 = vst [vmem:[%s250 + $0x6f0] sm:$0xf] %v905
          %1034 = vst [vmem:[%s250 + $0x700] sm:$0xf] %v906
          %1035 = vst [vmem:[%s250 + $0x710] sm:$0xf] %v907
          %1036 = vst [vmem:[%s250 + $0x720] sm:$0xf] %v908
          %1037 = vst [vmem:[%s250 + $0x730] sm:$0xf] %v909
          %1038 = vst [vmem:[%s250 + $0x740] sm:$0xf] %v910
          %1039 = vst [vmem:[%s250 + $0x750] sm:$0xf] %v911
          %1040 = vst [vmem:[%s250 + $0x760] sm:$0xf] %v912
          %1041 = vst [vmem:[%s250 + $0x770] sm:$0xf] %v913
          %1042 = vst [vmem:[%s250 + $0x780] sm:$0xf] %v914
          %1043 = vst [vmem:[%s250 + $0x790] sm:$0xf] %v915
          %1044 = vst [vmem:[%s250 + $0x7a0] sm:$0xf] %v916
          %1045 = vst [vmem:[%s250 + $0x7b0] sm:$0xf] %v917
          %1046 = vst [vmem:[%s250 + $0x7c0] sm:$0xf] %v918
          %1047 = vst [vmem:[%s250 + $0x7d0] sm:$0xf] %v919
          %1048 = vst [vmem:[%s250 + $0x7e0] sm:$0xf] %v920
          %1049 = vst [vmem:[%s250 + $0x7f0] sm:$0xf] %v921
        $region44: #{tpu_custom_call.1} parent=27 // pred_fallthru
          _
        %s1050 = sand.u32 %s110, 1
        %s1051 = scalar_lea.sflag [#allocation4], %s1050
        %s1052 = sand.u32 %s110, 1
        %s1053 = smul.addr %s1052, 2048
        %s1054 = scalar_lea.vmem [#allocation7], %s1053
        // Predicated region
        $region45: #{tpu_custom_call.1} parent=27 // pred_check
          %p1055 = pneg %p120
        $region46: #{tpu_custom_call.1} parent=27 // pred_check_branch
          %1057 = sbr.rel (%p1055) target = $region48
        $region47: #{tpu_custom_call.1} parent=27 // pred_region
          %s1058 = smul.u32 128, %s26
          %s1059 = smul.u32 8, %s27
          %s1060 = ssub.s32 1, %s1058
          %s1061 = smul.u32 32, %s1060
          %s1062 = ssub.s32 10, %s1059
          %p1063 = scmp.lt.s32.totalorder %s1062, 8
          %s1064 = scalar_select %p1063, %s1062, 8
          %s1065 = smul.u32 %s1061, %s1064
          %s1067 = ssub.s32 32768, %s1065
          %1068 = vsyncadd %s1051, %s1067
          %p1069 = scmp.ne.s32.totalorder 0, %s1065
          %s1070 = smul.addr %s1058, 10
          %s1071 = sadd.s32 %s1059, %s1070
          %s1072 = smul.addr %s1071, 32
          %s1073 = scalar_lea.hbm %s2, %s1072
          %s1074 = smul.u32 %s1064, 2
          %s1075 = smul.u32 %s1074, %s1060
          %s1076 = sshll.u32 %s1054, 4
          %s1077 = int_to_ptr.vmem [resolvable:$true] %s1076
          %s1078 = sshll.u32 %s1075, 4
          %1082 = dma.vmem_to_hbm [thread:$0]  (%p1069), %s1077, %s1078, %s1073, %s1051, 256, 320, %s1074
        $region48: #{tpu_custom_call.1} parent=27 // pred_fallthru
          _
      $region28: #{tpu_custom_call.1} parent=5 // pred_fallthru
        _
      %p1083 = scmp.le.s32.totalorder 2, %s17
      // Predicated region
      $region49: #{tpu_custom_call.1} parent=5 // pred_check
        %p1084 = pneg %p1083
      $region50: #{tpu_custom_call.1} parent=5 // pred_check_branch
        %1086 = sbr.rel (%p1084) target = $region52
      $region51: #{tpu_custom_call.1} parent=5 // pred_region
        %s1087 = ssub.s32 %s17, 2
        // Predicated region
        $region53: #{tpu_custom_call.1} parent=51 // pred_check
          %p1088 = pneg %p126
        $region54: #{tpu_custom_call.1} parent=51 // pred_check_branch
          %1090 = sbr.rel (%p1088) target = $region56
        $region55: #{tpu_custom_call.1} parent=51 // pred_region
          %s1091 = sand.u32 %s111, 1
          %s1092 = scalar_lea.sflag [#allocation4], %s1091
          %s1093 = sand.u32 %s111, 1
          %s1094 = smul.addr %s1093, 2048
          %s1095 = scalar_lea.vmem [#allocation7], %s1094
          %1096 = dma.done %s1092, 32768
        $region56: #{tpu_custom_call.1} parent=51 // pred_fallthru
          _
      $region52: #{tpu_custom_call.1} parent=5 // pred_fallthru
        _
    $region6: #{tpu_custom_call.1} parent=1 // loop_footer
      %s21 = sadd.s32 1, %s17
    $region7: #{tpu_custom_call.1} parent=1 // loop_footer_branch
      %16 = sbr.rel target = $region3
    $region8: #{tpu_custom_call.1} parent=1 // loop_exit
      _
    %1097 = vsyncpa [#allocation3], 1
    %s1098 = scalar_lea.sflag [#allocation3], 1
    %1099 = vsyncpa %s1098, 1
    %1100 = vsyncpa [#allocation6], 1
    %s1101 = scalar_lea.sflag [#allocation6], 1
    %1102 = vsyncpa %s1101, 1
    %1103 = vsyncpa [#allocation4], 1
    %s1104 = scalar_lea.sflag [#allocation4], 1
    %1105 = vsyncpa %s1104, 1

</llo_original>
